<compile_context>
chip_gen: v6e
topology: v6e:2x2x1
jax: 0.10.0
libtpu: 0.0.40
codegen_flags: <defaults>
</compile_context>

<pallas_src>
import functools

import jax
import jax.numpy as jnp
from jax.experimental import pallas as pl
from jax.experimental.pallas import tpu as pltpu


LEAKY_SLOPE = 0.01  # torch.nn.LeakyReLU default negative_slope (must be in (0, 1])
_LANE = 128


def _round_up(x, m):
    return ((x + m - 1) // m) * m


def _cdiv(a, b):
    return (a + b - 1) // b


def _make_mlp_kernel(num_linear, compute_dtype):
    """Kernel running all Linear(+LeakyReLU) layers fused on one batch tile."""

    def kernel(*refs):
        # refs = (x_ref, w0, b0, w1, b1, ..., w_{L-1}, b_{L-1}, o_ref)
        x_ref = refs[0]
        o_ref = refs[-1]
        param_refs = refs[1:-1]

        # In-kernel cast (VPU work hidden under the tile DMA) instead of a
        # separate wrapper-side pad/astype pass over x in HBM.
        h = x_ref[...].astype(compute_dtype)

        for i in range(num_linear):
            w = param_refs[2 * i][...]       # (Din, Dout_p) compute_dtype
            b = param_refs[2 * i + 1][...]   # (1, Dout_p)   float32
            acc = jnp.dot(h, w, preferred_element_type=jnp.float32) + b
            if i < num_linear - 1:
                # Downcast first, then LeakyReLU: packed bf16 VALU on v6e/v7x,
                # fewer live f32 vregs.  (Valid because 0 < slope <= 1.)
                h = acc.astype(compute_dtype)
                h = jnp.maximum(h, LEAKY_SLOPE * h)
            else:
                o_ref[...] = acc.astype(o_ref.dtype)

    return kernel


@functools.partial(
    jax.jit, static_argnames=("block_batch", "compute_dtype", "out_dtype")
)
def mlp_forward(
    x,
    params,
    *,
    block_batch=1024,
    compute_dtype=jnp.bfloat16,
    out_dtype=jnp.float32,
):
    """Fused MLP forward.

    x: (batch, input_dim), any float dtype (cast to compute_dtype in-kernel).
    params: list of (w, b) with w (din, dout), b (dout,) or (1, dout).
    block_batch: requested batch tile (sweep 512-2048 on v5e/v6e for large
                 batches; automatically shrunk so small batches still get
                 >=2 grid steps for v7x's two TensorCores).
    out_dtype: output dtype; jnp.bfloat16 halves writeback if acceptable.
    """
    batch, input_dim = x.shape
    num_linear = len(params)
    out_dim = params[-1][0].shape[1]

    # ---- feature dims -------------------------------------------------------
    # Hidden dims padded to 128 for lane-dense MXU tiles (VMEM-only cost).
    # input_dim and out_dim are left as-is so x and the output move exactly
    # their own bytes over HBM (no wrapper pad pass, no fat output slab).
    dims = [input_dim] + [w.shape[1] for (w, _) in params]
    pdims = list(dims)
    for i in range(1, num_linear):  # hidden dims only
        pdims[i] = _round_up(dims[i], _LANE)

    # ---- weights / biases (tiny, one-time pad + cast; VMEM-resident) --------
    flat_params = []
    for i, (w, b) in enumerate(params):
        wp = jnp.pad(
            w, ((0, pdims[i] - w.shape[0]), (0, pdims[i + 1] - w.shape[1]))
        ).astype(compute_dtype)
        b2 = b.reshape(1, -1)
        bp = jnp.pad(b2, ((0, 0), (0, pdims[i + 1] - b2.shape[1])))
        bp = bp.astype(jnp.float32)  # bias added after f32 accumulation
        flat_params += [wp, bp]

    # ---- batch tile ----------------------------------------------------------
    # bf16 packs two rows per sublane -> 16-row alignment; f32 -> 8.
    sub = 16 if jnp.dtype(compute_dtype).itemsize < 4 else 8
    # Cap the tile so the (parallel) batch axis has >=2 grid steps whenever the
    # batch allows it (keeps both v7x TensorCores busy); large batches still
    # get the full block_batch tile to amortize the ~0.35us per-step overhead.
    half = max(_round_up(_cdiv(batch, 2), sub), sub)
    eff_block = max(sub, min(_round_up(block_batch, sub), half))
    grid_b = _cdiv(batch, eff_block)  # last block may be partial; no batch pad

    # ---- VMEM budget ---------------------------------------------------------
    param_bytes = sum(int(p.size) * p.dtype.itemsize for p in flat_params)
    x_tile_bytes = eff_block * input_dim * x.dtype.itemsize
    o_tile_bytes = eff_block * out_dim * jnp.dtype(out_dtype).itemsize
    act_bytes = eff_block * max(pdims) * (4 + jnp.dtype(compute_dtype).itemsize)
    # Params/tiles may be double-buffered by the pipeliner -> factor 2.
    needed = 2 * param_bytes + 2 * (x_tile_bytes + o_tile_bytes) + act_bytes
    vmem_limit = int(min(max(needed + (8 << 20), 32 << 20), 48 << 20))
    # TODO(synk): if 2*param_bytes approaches v7x's 64 MiB VMEM (very wide
    # hidden layers), switch from weights-resident to tiling the largest
    # feature dim over an extra "arbitrary" grid axis with an f32 accumulator.

    in_specs = [pl.BlockSpec((eff_block, input_dim), lambda i: (i, 0))]
    for p in flat_params:
        # Small, resident parameters: full tensor, constant index_map
        # (no per-step re-DMA; only the x tile streams per grid step).
        in_specs.append(pl.BlockSpec(p.shape, lambda i: (0, 0)))
    out_spec = pl.BlockSpec((eff_block, out_dim), lambda i: (i, 0))

    out = pl.pallas_call(
        _make_mlp_kernel(num_linear, compute_dtype),
        out_shape=jax.ShapeDtypeStruct((batch, out_dim), out_dtype),
        grid_spec=pltpu.PrefetchScalarGridSpec(
            num_scalar_prefetch=0,
            grid=(grid_b,),
            in_specs=in_specs,
            out_specs=out_spec,
        ),
        compiler_params=pltpu.CompilerParams(
            dimension_semantics=("parallel",),  # batch axis: 2 TCs on v7x
            vmem_limit_bytes=vmem_limit,
        ),
    )(x, *flat_params)

    return out


def init_mlp_params(key, input_dim, layer_sizes):
    """Deterministic PyTorch-style init: U(-1/sqrt(fan_in), 1/sqrt(fan_in))."""
    dims = [input_dim] + list(layer_sizes) + [2]
    params = []
    for i in range(len(dims) - 1):
        fan_in, fan_out = dims[i], dims[i + 1]
        key, kw, kb = jax.random.split(key, 3)
        bound = 1.0 / (fan_in ** 0.5)
        w = jax.random.uniform(kw, (fan_in, fan_out), jnp.float32, -bound, bound)
        b = jax.random.uniform(kb, (fan_out,), jnp.float32, -bound, bound)
        params.append((w, b))
    return params


def mlp_reference(x, params):
    h = x
    for i, (w, b) in enumerate(params):
        h = h @ w + b
        if i < len(params) - 1:
            h = jnp.maximum(h, LEAKY_SLOPE * h)
    return h


if __name__ == "__main__":
    key = jax.random.PRNGKey(0)
    k_x, k_p = jax.random.split(key)

    batch = 40          # not a multiple of the tile -> exercises partial last block
    input_dim = 16
    layer_sizes = [32, 64]

    x = jax.random.normal(k_x, (batch, input_dim), dtype=jnp.float32)
    params = init_mlp_params(k_p, input_dim, layer_sizes)

    # bf16-compute path (default, perf config); small tile to get >1 grid step.
    out_bf16 = mlp_forward(x, params, block_batch=16)
    out_bf16 = jax.block_until_ready(out_bf16)

    # f32-compute path (tighter numerical check of the fused kernel logic).
    out_f32 = mlp_forward(x, params, block_batch=16, compute_dtype=jnp.float32)
    out_f32 = jax.block_until_ready(out_f32)

    ref = mlp_reference(x, params)

    assert out_bf16.shape == (batch, 2), out_bf16.shape
    assert out_f32.shape == (batch, 2), out_f32.shape
    assert jnp.allclose(out_f32, ref, atol=2e-2, rtol=2e-2), (
        float(jnp.max(jnp.abs(out_f32 - ref)))
    )
    assert jnp.allclose(out_bf16, ref, atol=5e-2, rtol=5e-2), (
        float(jnp.max(jnp.abs(out_bf16 - ref)))
    )

    print("KERNEL_OK")
</pallas_src>

<mosaic_0001>
module attributes {stable_mosaic.version = 11 : i64} {
  func.func @kernel(%arg0: i32, %arg1: memref<16x16xf32, #tpu.memory_space<vmem>>, %arg2: memref<16x128xbf16, #tpu.memory_space<vmem>>, %arg3: memref<1x128xf32, #tpu.memory_space<vmem>>, %arg4: memref<128x128xbf16, #tpu.memory_space<vmem>>, %arg5: memref<1x128xf32, #tpu.memory_space<vmem>>, %arg6: memref<128x2xbf16, #tpu.memory_space<vmem>>, %arg7: memref<1x2xf32, #tpu.memory_space<vmem>>, %arg8: memref<16x2xf32, #tpu.memory_space<vmem>>) attributes {dimension_semantics = [#tpu.dimension_semantics<parallel>], iteration_bounds = array<i64: 3>, scalar_prefetch = 0 : i64, scratch_operands = 0 : i64, tpu.core_type = #tpu.core_type<tc>, window_params = [{transform_indices = @transform_0, window_bounds = array<i64: 16, 16>}, {pipeline_mode = #tpu.pipeline_mode<synchronous>, transform_indices = @transform_1, window_bounds = array<i64: 16, 128>}, {pipeline_mode = #tpu.pipeline_mode<synchronous>, transform_indices = @transform_2, window_bounds = array<i64: 1, 128>}, {pipeline_mode = #tpu.pipeline_mode<synchronous>, transform_indices = @transform_3, window_bounds = array<i64: 128, 128>}, {pipeline_mode = #tpu.pipeline_mode<synchronous>, transform_indices = @transform_4, window_bounds = array<i64: 1, 128>}, {pipeline_mode = #tpu.pipeline_mode<synchronous>, transform_indices = @transform_5, window_bounds = array<i64: 128, 2>}, {pipeline_mode = #tpu.pipeline_mode<synchronous>, transform_indices = @transform_6, window_bounds = array<i64: 1, 2>}, {transform_indices = @transform_7, window_bounds = array<i64: 16, 2>}]} {
    %c0 = arith.constant 0 : index
    %c0_0 = arith.constant 0 : index
    %0 = vector.load %arg1[%c0, %c0_0] : memref<16x16xf32, #tpu.memory_space<vmem>>, vector<16x16xf32>
    %1 = arith.truncf %0 : vector<16x16xf32> to vector<16x16xbf16>
    %c0_1 = arith.constant 0 : index
    %c0_2 = arith.constant 0 : index
    %2 = vector.load %arg2[%c0_1, %c0_2] : memref<16x128xbf16, #tpu.memory_space<vmem>>, vector<16x128xbf16>
    %c0_3 = arith.constant 0 : index
    %c0_4 = arith.constant 0 : index
    %3 = vector.load %arg3[%c0_3, %c0_4] : memref<1x128xf32, #tpu.memory_space<vmem>>, vector<1x128xf32>
    %cst = arith.constant dense<0.000000e+00> : vector<16x128xf32>
    %4 = tpu.matmul %1, %2, %cst {dimension_numbers = #tpu.dot_dimension_numbers<[1], [0], [0], [1], [0, 0, 1, 1], [], []>} : vector<16x16xbf16>, vector<16x128xbf16>, vector<16x128xf32> -> vector<16x128xf32>
    %5 = vector.broadcast %3 : vector<1x128xf32> to vector<16x128xf32>
    %6 = arith.addf %4, %5 : vector<16x128xf32>
    %7 = arith.truncf %6 : vector<16x128xf32> to vector<16x128xbf16>
    %cst_5 = arith.constant 1.000980e-02 : bf16
    %8 = vector.broadcast %cst_5 : bf16 to vector<16x128xbf16>
    %9 = arith.mulf %8, %7 : vector<16x128xbf16>
    %10 = arith.maximumf %7, %9 : vector<16x128xbf16>
    %c0_6 = arith.constant 0 : index
    %c0_7 = arith.constant 0 : index
    %11 = vector.load %arg4[%c0_6, %c0_7] : memref<128x128xbf16, #tpu.memory_space<vmem>>, vector<128x128xbf16>
    %c0_8 = arith.constant 0 : index
    %c0_9 = arith.constant 0 : index
    %12 = vector.load %arg5[%c0_8, %c0_9] : memref<1x128xf32, #tpu.memory_space<vmem>>, vector<1x128xf32>
    %cst_10 = arith.constant dense<0.000000e+00> : vector<16x128xf32>
    %13 = tpu.matmul %10, %11, %cst_10 {dimension_numbers = #tpu.dot_dimension_numbers<[1], [0], [0], [1], [0, 0, 1, 1], [], []>} : vector<16x128xbf16>, vector<128x128xbf16>, vector<16x128xf32> -> vector<16x128xf32>
    %14 = vector.broadcast %12 : vector<1x128xf32> to vector<16x128xf32>
    %15 = arith.addf %13, %14 : vector<16x128xf32>
    %16 = arith.truncf %15 : vector<16x128xf32> to vector<16x128xbf16>
    %cst_11 = arith.constant 1.000980e-02 : bf16
    %17 = vector.broadcast %cst_11 : bf16 to vector<16x128xbf16>
    %18 = arith.mulf %17, %16 : vector<16x128xbf16>
    %19 = arith.maximumf %16, %18 : vector<16x128xbf16>
    %c0_12 = arith.constant 0 : index
    %c0_13 = arith.constant 0 : index
    %20 = vector.load %arg6[%c0_12, %c0_13] : memref<128x2xbf16, #tpu.memory_space<vmem>>, vector<128x2xbf16>
    %c0_14 = arith.constant 0 : index
    %c0_15 = arith.constant 0 : index
    %21 = vector.load %arg7[%c0_14, %c0_15] : memref<1x2xf32, #tpu.memory_space<vmem>>, vector<1x2xf32>
    %cst_16 = arith.constant dense<0.000000e+00> : vector<16x2xf32>
    %22 = tpu.matmul %19, %20, %cst_16 {dimension_numbers = #tpu.dot_dimension_numbers<[1], [0], [0], [1], [0, 0, 1, 1], [], []>} : vector<16x128xbf16>, vector<128x2xbf16>, vector<16x2xf32> -> vector<16x2xf32>
    %23 = vector.broadcast %21 : vector<1x2xf32> to vector<16x2xf32>
    %24 = arith.addf %22, %23 : vector<16x2xf32>
    %c0_17 = arith.constant 0 : index
    %c0_18 = arith.constant 0 : index
    %25 = vector.load %arg8[%c0_17, %c0_18] : memref<16x2xf32, #tpu.memory_space<vmem>>, vector<16x2xf32>
    tpu.vector_store %arg8[%c0_17, %c0_18], %24 {strides = array<i32>} : memref<16x2xf32, #tpu.memory_space<vmem>>, vector<16x2xf32>,
    return
  }
  func.func @transform_0(%arg0: i32) -> (i32, i32) {
    %c0_i32 = arith.constant 0 : i32
    %c0_i32_0 = arith.constant 0 : i32
    return %arg0, %c0_i32 : i32, i32
  }
  func.func @transform_1(%arg0: i32) -> (i32, i32) {
    %c0_i32 = arith.constant 0 : i32
    %c0_i32_0 = arith.constant 0 : i32
    %c0_i32_1 = arith.constant 0 : i32
    return %c0_i32, %c0_i32_0 : i32, i32
  }
  func.func @transform_2(%arg0: i32) -> (i32, i32) {
    %c0_i32 = arith.constant 0 : i32
    %c0_i32_0 = arith.constant 0 : i32
    %c0_i32_1 = arith.constant 0 : i32
    return %c0_i32, %c0_i32_0 : i32, i32
  }
  func.func @transform_3(%arg0: i32) -> (i32, i32) {
    %c0_i32 = arith.constant 0 : i32
    %c0_i32_0 = arith.constant 0 : i32
    %c0_i32_1 = arith.constant 0 : i32
    return %c0_i32, %c0_i32_0 : i32, i32
  }
  func.func @transform_4(%arg0: i32) -> (i32, i32) {
    %c0_i32 = arith.constant 0 : i32
    %c0_i32_0 = arith.constant 0 : i32
    %c0_i32_1 = arith.constant 0 : i32
    return %c0_i32, %c0_i32_0 : i32, i32
  }
  func.func @transform_5(%arg0: i32) -> (i32, i32) {
    %c0_i32 = arith.constant 0 : i32
    %c0_i32_0 = arith.constant 0 : i32
    %c0_i32_1 = arith.constant 0 : i32
    return %c0_i32, %c0_i32_0 : i32, i32
  }
  func.func @transform_6(%arg0: i32) -> (i32, i32) {
    %c0_i32 = arith.constant 0 : i32
    %c0_i32_0 = arith.constant 0 : i32
    %c0_i32_1 = arith.constant 0 : i32
    return %c0_i32, %c0_i32_0 : i32, i32
  }
  func.func @transform_7(%arg0: i32) -> (i32, i32) {
    %c0_i32 = arith.constant 0 : i32
    %c0_i32_0 = arith.constant 0 : i32
    return %arg0, %c0_i32 : i32, i32
  }
}

</mosaic_0001>

<llo_original>
// kernel: mlp_forward.1
$region0: #{mlp_forward.1}
  #allocation0 [shape = 'u32[]', space=smem, size = 0x4, offset = 0x4, fixed_abs, tag = 'smem constant byte address 0x4 - core index']
  #allocation1 [shape = 'u32[144,128]{1,0:T(1,128)}', space=vmem, size = 0x12000, scoped, tag = 'internal scratch']
  %s0 = inlined_call_operand.vmem [shape: f32[40,16], index: 0, kind: input, shape index: {}]
  %s1 = inlined_call_operand.vmem [shape: bf16[16,128], index: 1, kind: input, shape index: {}]
  %s2 = inlined_call_operand.vmem [shape: f32[1,128], index: 2, kind: input, shape index: {}]
  %s3 = inlined_call_operand.vmem [shape: bf16[128,128], index: 3, kind: input, shape index: {}]
  %s4 = inlined_call_operand.vmem [shape: f32[1,128], index: 4, kind: input, shape index: {}]
  %s5 = inlined_call_operand.vmem [shape: bf16[128,2], index: 5, kind: input, shape index: {}]
  %s6 = inlined_call_operand.vmem [shape: f32[1,2], index: 6, kind: input, shape index: {}]
  %s7 = inlined_call_operand.vmem [shape: f32[40,2], index: 7, kind: output, shape index: {}]
  %s8 = sld [smem:[#allocation0]]
  $region109: #{mlp_forward.1} parent=0
    _
  %s10 = ssub.s32 1, %s8
  %s11 = scalar_select 0, %s10, %s8
  $region1: #{mlp_forward.1} parent=0
    #allocation2 [shape = 'u8[16384]{0}', space=vmem, size = 0x4000, scoped, tag = 'output window, operand 0']
    loop: start=0, step=1, limit=5
    $region2: #{mlp_forward.1} parent=1 // loop_pre_header
      _
    $region3: #{mlp_forward.1} parent=1 // loop_header
      %s13 = sphi 0, %s17
      %p14 = scmp.ge.s32.totalorder %s13, 5
      %s23 = sphi 0, %s25
      %s26 = sphi 0, %s23
      %s27 = sphi 0, %s26
      %s43 = sphi 0, %s27
      %s47 = sphi 0, %s47
      %s49 = sphi 0, %s47
      %s50 = sphi 0, %s49
      %s64 = sphi 0, %s50
      %s68 = sphi 0, %s68
      %s70 = sphi 0, %s68
      %s71 = sphi 0, %s70
      %s85 = sphi 0, %s71
      %s89 = sphi 0, %s89
      %s91 = sphi 0, %s89
      %s92 = sphi 0, %s91
      %s106 = sphi 0, %s92
      %s110 = sphi 0, %s110
      %s112 = sphi 0, %s110
      %s113 = sphi 0, %s112
      %s127 = sphi 0, %s113
      %s131 = sphi 0, %s131
      %s133 = sphi 0, %s131
      %s134 = sphi 0, %s133
      %s148 = sphi 0, %s134
      %s152 = sphi 0, %s152
      %s154 = sphi 0, %s152
      %s155 = sphi 0, %s154
      %s169 = sphi 0, %s155
      %s175 = sphi 0, %s177
      %s178 = sphi 0, %s175
      %s179 = sphi 0, %s178
      %s195 = sphi 0, %s179
    $region4: #{mlp_forward.1} parent=1 // loop_header_branch
      %16 = sbr.rel (%p14) target = $region8
    $region5: #{mlp_forward.1} parent=1 // loop_body
      %s18 = ssub.s32 %s13, 1
      %s19 = ssub.s32 %s13, 2
      %s20 = sadd.s32 %s13, 1
      %s21 = ssub.s32 %s13, %s20
      %p22 = scmp.eq.s32.totalorder %s21, 0
      %s24 = sadd.s32 %s23, 1
      %s25 = scalar_select %p22, %s23, %s24
      %p28 = pneg %p22
      %p29 = scmp.eq.s32.totalorder %s13, 2
      %p30 = por %p28, %p29
      %p31 = scmp.ne.s32.totalorder %s23, %s26
      %p32 = scmp.eq.s32.totalorder %s13, 0
      %p33 = por %p31, %p32
      %p34 = scmp.ne.s32.totalorder %s23, %s26
      %p35 = scmp.eq.s32.totalorder %s18, 2
      %p36 = por %p34, %p35
      %p37 = scmp.ne.s32.totalorder %s26, %s27
      %p38 = scmp.eq.s32.totalorder %s18, 0
      %p39 = por %p37, %p38
      %p40 = scmp.ne.s32.totalorder %s26, %s27
      %p41 = scmp.eq.s32.totalorder %s19, 2
      %p42 = por %p40, %p41
      %p44 = scmp.ne.s32.totalorder %s27, %s43
      %p45 = scmp.eq.s32.totalorder %s19, 0
      %p46 = por %p44, %p45
      %s48 = sadd.s32 %s47, 1
      %p51 = scmp.eq.s32.totalorder %s13, 2
      %p52 = scmp.ne.s32.totalorder %s47, %s49
      %p53 = scmp.eq.s32.totalorder %s13, 0
      %p54 = por %p52, %p53
      %p55 = scmp.ne.s32.totalorder %s47, %s49
      %p56 = scmp.eq.s32.totalorder %s18, 2
      %p57 = por %p55, %p56
      %p58 = scmp.ne.s32.totalorder %s49, %s50
      %p59 = scmp.eq.s32.totalorder %s18, 0
      %p60 = por %p58, %p59
      %p61 = scmp.ne.s32.totalorder %s49, %s50
      %p62 = scmp.eq.s32.totalorder %s19, 2
      %p63 = por %p61, %p62
      %p65 = scmp.ne.s32.totalorder %s50, %s64
      %p66 = scmp.eq.s32.totalorder %s19, 0
      %p67 = por %p65, %p66
      %s69 = sadd.s32 %s68, 1
      %p72 = scmp.eq.s32.totalorder %s13, 2
      %p73 = scmp.ne.s32.totalorder %s68, %s70
      %p74 = scmp.eq.s32.totalorder %s13, 0
      %p75 = por %p73, %p74
      %p76 = scmp.ne.s32.totalorder %s68, %s70
      %p77 = scmp.eq.s32.totalorder %s18, 2
      %p78 = por %p76, %p77
      %p79 = scmp.ne.s32.totalorder %s70, %s71
      %p80 = scmp.eq.s32.totalorder %s18, 0
      %p81 = por %p79, %p80
      %p82 = scmp.ne.s32.totalorder %s70, %s71
      %p83 = scmp.eq.s32.totalorder %s19, 2
      %p84 = por %p82, %p83
      %p86 = scmp.ne.s32.totalorder %s71, %s85
      %p87 = scmp.eq.s32.totalorder %s19, 0
      %p88 = por %p86, %p87
      %s90 = sadd.s32 %s89, 1
      %p93 = scmp.eq.s32.totalorder %s13, 2
      %p94 = scmp.ne.s32.totalorder %s89, %s91
      %p95 = scmp.eq.s32.totalorder %s13, 0
      %p96 = por %p94, %p95
      %p97 = scmp.ne.s32.totalorder %s89, %s91
      %p98 = scmp.eq.s32.totalorder %s18, 2
      %p99 = por %p97, %p98
      %p100 = scmp.ne.s32.totalorder %s91, %s92
      %p101 = scmp.eq.s32.totalorder %s18, 0
      %p102 = por %p100, %p101
      %p103 = scmp.ne.s32.totalorder %s91, %s92
      %p104 = scmp.eq.s32.totalorder %s19, 2
      %p105 = por %p103, %p104
      %p107 = scmp.ne.s32.totalorder %s92, %s106
      %p108 = scmp.eq.s32.totalorder %s19, 0
      %p109 = por %p107, %p108
      %s111 = sadd.s32 %s110, 1
      %p114 = scmp.eq.s32.totalorder %s13, 2
      %p115 = scmp.ne.s32.totalorder %s110, %s112
      %p116 = scmp.eq.s32.totalorder %s13, 0
      %p117 = por %p115, %p116
      %p118 = scmp.ne.s32.totalorder %s110, %s112
      %p119 = scmp.eq.s32.totalorder %s18, 2
      %p120 = por %p118, %p119
      %p121 = scmp.ne.s32.totalorder %s112, %s113
      %p122 = scmp.eq.s32.totalorder %s18, 0
      %p123 = por %p121, %p122
      %p124 = scmp.ne.s32.totalorder %s112, %s113
      %p125 = scmp.eq.s32.totalorder %s19, 2
      %p126 = por %p124, %p125
      %p128 = scmp.ne.s32.totalorder %s113, %s127
      %p129 = scmp.eq.s32.totalorder %s19, 0
      %p130 = por %p128, %p129
      %s132 = sadd.s32 %s131, 1
      %p135 = scmp.eq.s32.totalorder %s13, 2
      %p136 = scmp.ne.s32.totalorder %s131, %s133
      %p137 = scmp.eq.s32.totalorder %s13, 0
      %p138 = por %p136, %p137
      %p139 = scmp.ne.s32.totalorder %s131, %s133
      %p140 = scmp.eq.s32.totalorder %s18, 2
      %p141 = por %p139, %p140
      %p142 = scmp.ne.s32.totalorder %s133, %s134
      %p143 = scmp.eq.s32.totalorder %s18, 0
      %p144 = por %p142, %p143
      %p145 = scmp.ne.s32.totalorder %s133, %s134
      %p146 = scmp.eq.s32.totalorder %s19, 2
      %p147 = por %p145, %p146
      %p149 = scmp.ne.s32.totalorder %s134, %s148
      %p150 = scmp.eq.s32.totalorder %s19, 0
      %p151 = por %p149, %p150
      %s153 = sadd.s32 %s152, 1
      %p156 = scmp.eq.s32.totalorder %s13, 2
      %p157 = scmp.ne.s32.totalorder %s152, %s154
      %p158 = scmp.eq.s32.totalorder %s13, 0
      %p159 = por %p157, %p158
      %p160 = scmp.ne.s32.totalorder %s152, %s154
      %p161 = scmp.eq.s32.totalorder %s18, 2
      %p162 = por %p160, %p161
      %p163 = scmp.ne.s32.totalorder %s154, %s155
      %p164 = scmp.eq.s32.totalorder %s18, 0
      %p165 = por %p163, %p164
      %p166 = scmp.ne.s32.totalorder %s154, %s155
      %p167 = scmp.eq.s32.totalorder %s19, 2
      %p168 = por %p166, %p167
      %p170 = scmp.ne.s32.totalorder %s155, %s169
      %p171 = scmp.eq.s32.totalorder %s19, 0
      %p172 = por %p170, %p171
      %s173 = ssub.s32 %s13, %s20
      %p174 = scmp.eq.s32.totalorder %s173, 0
      %s176 = sadd.s32 %s175, 1
      %s177 = scalar_select %p174, %s175, %s176
      %p180 = pneg %p174
      %p181 = scmp.eq.s32.totalorder %s13, 2
      %p182 = por %p180, %p181
      %p183 = scmp.ne.s32.totalorder %s175, %s178
      %p184 = scmp.eq.s32.totalorder %s13, 0
      %p185 = por %p183, %p184
      %p186 = scmp.ne.s32.totalorder %s175, %s178
      %p187 = scmp.eq.s32.totalorder %s18, 2
      %p188 = por %p186, %p187
      %p189 = scmp.ne.s32.totalorder %s178, %s179
      %p190 = scmp.eq.s32.totalorder %s18, 0
      %p191 = por %p189, %p190
      %p192 = scmp.ne.s32.totalorder %s178, %s179
      %p193 = scmp.eq.s32.totalorder %s19, 2
      %p194 = por %p192, %p193
      %p196 = scmp.ne.s32.totalorder %s179, %s195
      %p197 = scmp.eq.s32.totalorder %s19, 0
      %p198 = por %p196, %p197
      %p199 = scmp.le.s32.totalorder 1, %s13
      %p200 = scmp.lt.s32.totalorder %s13, 4
      %p201 = pnand %p199, %p200
      %p202 = pneg %p201
      // Predicated region
      $region9: #{mlp_forward.1} parent=5 // pred_check
        _
      $region10: #{mlp_forward.1} parent=5 // pred_check_branch
        %204 = sbr.rel (%p201) target = $region12
      $region11: #{mlp_forward.1} parent=5 // pred_region
        %s205 = ssub.s32 %s13, 1
        // Predicated region
        $region13: #{mlp_forward.1} parent=11 // pred_check
          %p206 = pneg %p60
        $region14: #{mlp_forward.1} parent=11 // pred_check_branch
          %208 = sbr.rel (%p206) target = $region16
        $region15: #{mlp_forward.1} parent=11 // pred_region
          _
        $region16: #{mlp_forward.1} parent=11 // pred_fallthru
          _
        // Predicated region
        $region17: #{mlp_forward.1} parent=11 // pred_check
          %p209 = pneg %p81
        $region18: #{mlp_forward.1} parent=11 // pred_check_branch
          %211 = sbr.rel (%p209) target = $region20
        $region19: #{mlp_forward.1} parent=11 // pred_region
          _
        $region20: #{mlp_forward.1} parent=11 // pred_fallthru
          _
        // Predicated region
        $region21: #{mlp_forward.1} parent=11 // pred_check
          %p212 = pneg %p102
        $region22: #{mlp_forward.1} parent=11 // pred_check_branch
          %214 = sbr.rel (%p212) target = $region24
        $region23: #{mlp_forward.1} parent=11 // pred_region
          _
        $region24: #{mlp_forward.1} parent=11 // pred_fallthru
          _
        // Predicated region
        $region25: #{mlp_forward.1} parent=11 // pred_check
          %p215 = pneg %p123
        $region26: #{mlp_forward.1} parent=11 // pred_check_branch
          %217 = sbr.rel (%p215) target = $region28
        $region27: #{mlp_forward.1} parent=11 // pred_region
          _
        $region28: #{mlp_forward.1} parent=11 // pred_fallthru
          _
        // Predicated region
        $region29: #{mlp_forward.1} parent=11 // pred_check
          %p218 = pneg %p144
        $region30: #{mlp_forward.1} parent=11 // pred_check_branch
          %220 = sbr.rel (%p218) target = $region32
        $region31: #{mlp_forward.1} parent=11 // pred_region
          _
        $region32: #{mlp_forward.1} parent=11 // pred_fallthru
          _
        // Predicated region
        $region33: #{mlp_forward.1} parent=11 // pred_check
          %p221 = pneg %p165
        $region34: #{mlp_forward.1} parent=11 // pred_check_branch
          %223 = sbr.rel (%p221) target = $region36
        $region35: #{mlp_forward.1} parent=11 // pred_region
          _
        $region36: #{mlp_forward.1} parent=11 // pred_fallthru
          _
      $region12: #{mlp_forward.1} parent=5 // pred_fallthru
        _
      %p224 = scmp.lt.s32.totalorder %s13, 3
      // Predicated region
      $region37: #{mlp_forward.1} parent=5 // pred_check
        %p225 = pneg %p224
      $region38: #{mlp_forward.1} parent=5 // pred_check_branch
        %227 = sbr.rel (%p225) target = $region40
      $region39: #{mlp_forward.1} parent=5 // pred_region
        // Predicated region
        $region41: #{mlp_forward.1} parent=39 // pred_check
          %p228 = pneg %p33
        $region42: #{mlp_forward.1} parent=39 // pred_check_branch
          %230 = sbr.rel (%p228) target = $region44
        $region43: #{mlp_forward.1} parent=39 // pred_region
          %s231 = smul.u32 2, %s13
          %s232 = ssub.s32 5, %s231
          %p233 = scmp.lt.s32.totalorder %s232, 2
          %s234 = scalar_select %p233, %s232, 2
          %s235 = smul.u32 128, %s234
          %p236 = scmp.lt.s32.totalorder %s231, 4
          %s237 = scalar_select %p236, %s231, 4
          %s238 = smul.addr %s237, 8
          %s239 = scalar_lea.vmem %s0, %s238
          %s240 = smul.u32 2, %s13
          %s241 = ssub.s32 5, %s240
          %p242 = scmp.lt.s32.totalorder %s241, 2
          %s243 = scalar_select %p242, %s241, 2
          %s244 = smul.u32 128, %s243
        $region44: #{mlp_forward.1} parent=39 // pred_fallthru
          _
      $region40: #{mlp_forward.1} parent=5 // pred_fallthru
        _
      %p245 = scmp.le.s32.totalorder 1, %s13
      %p246 = scmp.lt.s32.totalorder %s13, 4
      %p247 = pnand %p245, %p246
      %p248 = pneg %p247
      // Predicated region
      $region45: #{mlp_forward.1} parent=5 // pred_check
        _
      $region46: #{mlp_forward.1} parent=5 // pred_check_branch
        %250 = sbr.rel (%p247) target = $region48
      $region47: #{mlp_forward.1} parent=5 // pred_region
        %s251 = ssub.s32 %s13, 1
        %s252 = smul.u32 2, %s18
        %s253 = ssub.s32 5, %s252
        %p254 = scmp.lt.s32.totalorder %s253, 2
        %s255 = scalar_select %p254, %s253, 2
        %s256 = smul.u32 128, %s255
        %p257 = scmp.lt.s32.totalorder %s252, 4
        %s258 = scalar_select %p257, %s252, 4
        %s259 = smul.addr %s258, 8
        %s260 = scalar_lea.vmem %s0, %s259
        %p261 = pneg %p39
        %p262 = pneg %p36
        %p263 = pneg %p60
        %p264 = pneg %p57
        %p265 = pneg %p81
        %p266 = pneg %p78
        %p267 = pneg %p102
        %p268 = pneg %p99
        %p269 = pneg %p123
        %p270 = pneg %p120
        %p271 = pneg %p144
        %p272 = pneg %p141
        %p273 = pneg %p165
        %p274 = pneg %p162
        %p275 = pneg %p191
        %p276 = pneg %p188
        %s277 = sand.u32 %s178, 1
        %s278 = sand.u32 %s178, 1
        %s279 = smul.addr %s278, 16
        %s280 = scalar_lea.vmem [#allocation2], %s279
        %s281 = smul.u32 2, %s18
        %s282 = ssub.s32 5, %s281
        %p283 = scmp.lt.s32.totalorder %s282, 2
        %s284 = scalar_select %p283, %s282, 2
        %s285 = smul.u32 128, %s284
        %p286 = scmp.lt.s32.totalorder %s281, 4
        %s287 = scalar_select %p286, %s281, 4
        %s288 = smul.addr %s287, 8
        %s289 = scalar_lea.vmem %s0, %s288
        %s290 = smul.u32 2, %s18
        %s291 = ssub.s32 5, %s290
        %p292 = scmp.lt.s32.totalorder %s291, 2
        %s293 = scalar_select %p292, %s291, 2
        %s294 = smul.u32 128, %s293
        %s295 = smul.u32 2, %s18
        %s296 = ssub.s32 5, %s295
        %p297 = scmp.lt.s32.totalorder %s296, 2
        %s298 = scalar_select %p297, %s296, 2
        %s299 = smul.u32 128, %s298
        %v302 = vld [vmem:[%s289] sm:$0xff]
        %v303 = vld [vmem:[%s289 + $0x8] sm:$0xff]
        %v304 = vpack.c.bf16 %v303, %v302
        %v305 = vld [vmem:[%s1] sm:$0xf]
        %v306 = vld [vmem:[%s1 + $0x4] sm:$0xf]
        %v307 = vld [vmem:[%s2] sm:$0x1]
        %v309 = vlaneseq
        %v310 = vshrl.u32 %v309, 7
        %v311 = vsub.s32 0, %v310
        %v312 = vrot.slane %v307, %v311
        %v316 = vunpack.c.l.b16 %v305
        %v317 = vunpack.c.l.b16 %v306
        %v318 = vpack.c.b16 %v317, %v316
        %vm320 = vcmask 130048
        %v322 = vsel %vm320, %v304, 0
        %324 = vmatprep.subr.bf16.mxu0 0
        %325 = vmatpush1.bf16.msra.mxu0 0
        %326 = vmatprep.subr.bf16.mxu0 0
        %327 = vmatpush1.bf16.msra.mxu0 0
        %328 = vmatprep.subr.bf16.mxu0 0
        %329 = vmatpush1.bf16.msra.mxu0 0
        %330 = vmatprep.subr.bf16.mxu0 0
        %331 = vmatpush1.bf16.msra.mxu0 0
        %332 = vmatprep.subr.bf16.mxu0 0
        %333 = vmatpush1.bf16.msra.mxu0 0
        %334 = vmatprep.subr.bf16.mxu0 0
        %335 = vmatpush1.bf16.msra.mxu0 0
        %336 = vmatprep.subr.bf16.mxu0 0
        %337 = vmatpush1.bf16.msra.mxu0 0
        %338 = vmatprep.subr.bf16.mxu0 0
        %339 = vmatpush1.bf16.msra.mxu0 %v318
        %340 = vmatprep.subr.bf16.mxu0 0
        %341 = vmatpush2.bf16.msra.mxu0 0
        %342 = vmatprep.subr.bf16.mxu0 0
        %343 = vmatpush2.bf16.msra.mxu0 0
        %344 = vmatprep.subr.bf16.mxu0 0
        %345 = vmatpush2.bf16.msra.mxu0 0
        %346 = vmatprep.subr.bf16.mxu0 0
        %347 = vmatpush2.bf16.msra.mxu0 0
        %348 = vmatprep.subr.bf16.mxu0 0
        %349 = vmatpush2.bf16.msra.mxu0 0
        %350 = vmatprep.subr.bf16.mxu0 0
        %351 = vmatpush2.bf16.msra.mxu0 0
        %352 = vmatprep.subr.bf16.mxu0 0
        %353 = vmatpush2.bf16.msra.mxu0 0
        %354 = vmatprep.subr.bf16.mxu0 0
        %355 = vmatpush2.bf16.msra.mxu0 0
        %356 = vmatprep.mubr.bf16.mxu0 0
        %357 = vmatmul.mubr.bf16.gmra.mxu0 %v322
        %v358 = vpop.f32.mrf.mxu0
        %v359 = vadd.f32 %v312, %v358
        %v360 = vpop.f32.mrf.mxu0
        %v361 = vpop.f32.mrf.mxu0
        %v362 = vadd.f32 %v312, %v361
        %v363 = vpop.f32.mrf.mxu0
        %364 = vdwg.mxu0
        %v365 = vpack.c.bf16 %v362, %v359
        %v366 = vmul.bf16 %v365, 1009007652
        %v367 = vmax.bf16 %v365, %v366
        %v368 = vld [vmem:[%s3] sm:$0xf]
        %v369 = vld [vmem:[%s3 + $0x4] sm:$0xf]
        %v370 = vld [vmem:[%s3 + $0x8] sm:$0xf]
        %v371 = vld [vmem:[%s3 + $0xc] sm:$0xf]
        %v372 = vld [vmem:[%s3 + $0x10] sm:$0xf]
        %v373 = vld [vmem:[%s3 + $0x14] sm:$0xf]
        %v374 = vld [vmem:[%s3 + $0x18] sm:$0xf]
        %v375 = vld [vmem:[%s3 + $0x1c] sm:$0xf]
        %v376 = vld [vmem:[%s3 + $0x20] sm:$0xf]
        %v377 = vld [vmem:[%s3 + $0x24] sm:$0xf]
        %v378 = vld [vmem:[%s3 + $0x28] sm:$0xf]
        %v379 = vld [vmem:[%s3 + $0x2c] sm:$0xf]
        %v380 = vld [vmem:[%s3 + $0x30] sm:$0xf]
        %v381 = vld [vmem:[%s3 + $0x34] sm:$0xf]
        %v382 = vld [vmem:[%s3 + $0x38] sm:$0xf]
        %v383 = vld [vmem:[%s3 + $0x3c] sm:$0xf]
        %v384 = vld [vmem:[%s4] sm:$0x1]
        %v386 = vlaneseq
        %v387 = vshrl.u32 %v386, 7
        %v388 = vsub.s32 0, %v387
        %v389 = vrot.slane %v384, %v388
        %v407 = vunpack.c.l.b16 %v368
        %v408 = vunpack.c.l.b16 %v369
        %v409 = vunpack.c.l.b16 %v370
        %v410 = vunpack.c.l.b16 %v371
        %v411 = vunpack.c.l.b16 %v372
        %v412 = vunpack.c.l.b16 %v373
        %v413 = vunpack.c.l.b16 %v374
        %v414 = vunpack.c.l.b16 %v375
        %v415 = vunpack.c.l.b16 %v376
        %v416 = vunpack.c.l.b16 %v377
        %v417 = vunpack.c.l.b16 %v378
        %v418 = vunpack.c.l.b16 %v379
        %v419 = vunpack.c.l.b16 %v380
        %v420 = vunpack.c.l.b16 %v381
        %v421 = vunpack.c.l.b16 %v382
        %v422 = vunpack.c.l.b16 %v383
        %v423 = vpack.c.b16 %v408, %v407
        %v424 = vpack.c.b16 %v410, %v409
        %v425 = vpack.c.b16 %v412, %v411
        %v426 = vpack.c.b16 %v414, %v413
        %v427 = vpack.c.b16 %v416, %v415
        %v428 = vpack.c.b16 %v418, %v417
        %v429 = vpack.c.b16 %v420, %v419
        %v430 = vpack.c.b16 %v422, %v421
        %439 = vmatprep.subr.bf16.mxu0 0
        %440 = vmatpush1.bf16.msra.mxu0 %v430
        %441 = vmatprep.subr.bf16.mxu0 0
        %442 = vmatpush1.bf16.msra.mxu0 %v429
        %443 = vmatprep.subr.bf16.mxu0 0
        %444 = vmatpush1.bf16.msra.mxu0 %v428
        %445 = vmatprep.subr.bf16.mxu0 0
        %446 = vmatpush1.bf16.msra.mxu0 %v427
        %447 = vmatprep.subr.bf16.mxu0 0
        %448 = vmatpush1.bf16.msra.mxu0 %v426
        %449 = vmatprep.subr.bf16.mxu0 0
        %450 = vmatpush1.bf16.msra.mxu0 %v425
        %451 = vmatprep.subr.bf16.mxu0 0
        %452 = vmatpush1.bf16.msra.mxu0 %v424
        %453 = vmatprep.subr.bf16.mxu0 0
        %454 = vmatpush1.bf16.msra.mxu0 %v423
        %455 = vmatprep.subr.bf16.mxu0 0
        %456 = vmatpush2.bf16.msra.mxu0 0
        %457 = vmatprep.subr.bf16.mxu0 0
        %458 = vmatpush2.bf16.msra.mxu0 0
        %459 = vmatprep.subr.bf16.mxu0 0
        %460 = vmatpush2.bf16.msra.mxu0 0
        %461 = vmatprep.subr.bf16.mxu0 0
        %462 = vmatpush2.bf16.msra.mxu0 0
        %463 = vmatprep.subr.bf16.mxu0 0
        %464 = vmatpush2.bf16.msra.mxu0 0
        %465 = vmatprep.subr.bf16.mxu0 0
        %466 = vmatpush2.bf16.msra.mxu0 0
        %467 = vmatprep.subr.bf16.mxu0 0
        %468 = vmatpush2.bf16.msra.mxu0 0
        %469 = vmatprep.subr.bf16.mxu0 0
        %470 = vmatpush2.bf16.msra.mxu0 0
        %471 = vmatprep.mubr.bf16.mxu0 0
        %472 = vmatmul.mubr.bf16.gmra.mxu0 %v367
        %v473 = vpop.f32.mrf.mxu0
        %v474 = vadd.f32 %v389, %v473
        %v475 = vpop.f32.mrf.mxu0
        %v476 = vpop.f32.mrf.mxu0
        %v477 = vadd.f32 %v389, %v476
        %v478 = vpop.f32.mrf.mxu0
        %479 = vdwg.mxu0
        %v480 = vpack.c.bf16 %v477, %v474
        %v481 = vmul.bf16 %v480, 1009007652
        %v482 = vmax.bf16 %v480, %v481
        %v483 = vld [vmem:[%s5] sm:$0xf]
        %v484 = vld [vmem:[%s5 + $0x4] sm:$0xf]
        %v485 = vld [vmem:[%s5 + $0x8] sm:$0xf]
        %v486 = vld [vmem:[%s5 + $0xc] sm:$0xf]
        %v487 = vld [vmem:[%s5 + $0x10] sm:$0xf]
        %v488 = vld [vmem:[%s5 + $0x14] sm:$0xf]
        %v489 = vld [vmem:[%s5 + $0x18] sm:$0xf]
        %v490 = vld [vmem:[%s5 + $0x1c] sm:$0xf]
        %v491 = vld [vmem:[%s5 + $0x20] sm:$0xf]
        %v492 = vld [vmem:[%s5 + $0x24] sm:$0xf]
        %v493 = vld [vmem:[%s5 + $0x28] sm:$0xf]
        %v494 = vld [vmem:[%s5 + $0x2c] sm:$0xf]
        %v495 = vld [vmem:[%s5 + $0x30] sm:$0xf]
        %v496 = vld [vmem:[%s5 + $0x34] sm:$0xf]
        %v497 = vld [vmem:[%s5 + $0x38] sm:$0xf]
        %v498 = vld [vmem:[%s5 + $0x3c] sm:$0xf]
        %v499 = vld [vmem:[%s6] sm:$0x1]
        %v501 = vlaneseq
        %v502 = vshrl.u32 %v501, 7
        %v503 = vsub.s32 0, %v502
        %v504 = vrot.slane %v499, %v503
        %v522 = vunpack.c.l.b16 %v483
        %v523 = vunpack.c.l.b16 %v484
        %v524 = vunpack.c.l.b16 %v485
        %v525 = vunpack.c.l.b16 %v486
        %v526 = vunpack.c.l.b16 %v487
        %v527 = vunpack.c.l.b16 %v488
        %v528 = vunpack.c.l.b16 %v489
        %v529 = vunpack.c.l.b16 %v490
        %v530 = vunpack.c.l.b16 %v491
        %v531 = vunpack.c.l.b16 %v492
        %v532 = vunpack.c.l.b16 %v493
        %v533 = vunpack.c.l.b16 %v494
        %v534 = vunpack.c.l.b16 %v495
        %v535 = vunpack.c.l.b16 %v496
        %v536 = vunpack.c.l.b16 %v497
        %v537 = vunpack.c.l.b16 %v498
        %v538 = vpack.c.b16 %v523, %v522
        %v539 = vpack.c.b16 %v525, %v524
        %v540 = vpack.c.b16 %v527, %v526
        %v541 = vpack.c.b16 %v529, %v528
        %v542 = vpack.c.b16 %v531, %v530
        %v543 = vpack.c.b16 %v533, %v532
        %v544 = vpack.c.b16 %v535, %v534
        %v545 = vpack.c.b16 %v537, %v536
        %554 = vmatprep.subr.bf16.mxu0 0
        %555 = vmatpush1.bf16.msra.mxu0 %v545
        %556 = vmatprep.subr.bf16.mxu0 0
        %557 = vmatpush1.bf16.msra.mxu0 %v544
        %558 = vmatprep.subr.bf16.mxu0 0
        %559 = vmatpush1.bf16.msra.mxu0 %v543
        %560 = vmatprep.subr.bf16.mxu0 0
        %561 = vmatpush1.bf16.msra.mxu0 %v542
        %562 = vmatprep.subr.bf16.mxu0 0
        %563 = vmatpush1.bf16.msra.mxu0 %v541
        %564 = vmatprep.subr.bf16.mxu0 0
        %565 = vmatpush1.bf16.msra.mxu0 %v540
        %566 = vmatprep.subr.bf16.mxu0 0
        %567 = vmatpush1.bf16.msra.mxu0 %v539
        %568 = vmatprep.subr.bf16.mxu0 0
        %569 = vmatpush1.bf16.msra.mxu0 %v538
        %570 = vmatprep.subr.bf16.mxu0 0
        %571 = vmatpush2.bf16.msra.mxu0 0
        %572 = vmatprep.subr.bf16.mxu0 0
        %573 = vmatpush2.bf16.msra.mxu0 0
        %574 = vmatprep.subr.bf16.mxu0 0
        %575 = vmatpush2.bf16.msra.mxu0 0
        %576 = vmatprep.subr.bf16.mxu0 0
        %577 = vmatpush2.bf16.msra.mxu0 0
        %578 = vmatprep.subr.bf16.mxu0 0
        %579 = vmatpush2.bf16.msra.mxu0 0
        %580 = vmatprep.subr.bf16.mxu0 0
        %581 = vmatpush2.bf16.msra.mxu0 0
        %582 = vmatprep.subr.bf16.mxu0 0
        %583 = vmatpush2.bf16.msra.mxu0 0
        %584 = vmatprep.subr.bf16.mxu0 0
        %585 = vmatpush2.bf16.msra.mxu0 0
        %586 = vmatprep.mubr.bf16.mxu0 0
        %587 = vmatmul.mubr.bf16.gmra.mxu0 %v482
        %v588 = vpop.f32.mrf.mxu0
        %v589 = vadd.f32 %v504, %v588
        %v590 = vpop.f32.mrf.mxu0
        %v591 = vpop.f32.mrf.mxu0
        %v592 = vadd.f32 %v504, %v591
        %v593 = vpop.f32.mrf.mxu0
        %594 = vdwg.mxu0
        %vm595 = vcmask 15360
        %596 = vst.msk [vmem:[%s280] sm:$0xff] %vm595, %v589
        %597 = vst.msk [vmem:[%s280 + $0x8] sm:$0xff] %vm595, %v592
        %s598 = sand.u32 %s178, 1
        %s599 = sand.u32 %s178, 1
        %s600 = smul.addr %s599, 16
        %s601 = scalar_lea.vmem [#allocation2], %s600
        // Predicated region
        $region49: #{mlp_forward.1} parent=47 // pred_check
          %p602 = pneg %p188
        $region50: #{mlp_forward.1} parent=47 // pred_check_branch
          %604 = sbr.rel (%p602) target = $region52
        $region51: #{mlp_forward.1} parent=47 // pred_region
          %s605 = smul.u32 2, %s18
          %s606 = ssub.s32 5, %s605
          %p607 = scmp.lt.s32.totalorder %s606, 2
          %s608 = scalar_select %p607, %s606, 2
          %s609 = smul.u32 128, %s608
          %p610 = scmp.ne.s32.totalorder 0, %s609
          %s611 = smul.addr %s605, 8
          %s612 = scalar_lea.vmem %s7, %s611
          // Predicated region
          $region53: #{mlp_forward.1} parent=51 // pred_check
            %p613 = pneg %p610
          $region54: #{mlp_forward.1} parent=51 // pred_check_branch
            %615 = sbr.rel (%p613) target = $region56
          $region55: #{mlp_forward.1} parent=51 // pred_region
            // Predicated region
            $region57: #{mlp_forward.1} parent=55 // pred_check
              _
            $region58: #{mlp_forward.1} parent=55 // pred_check_branch
              %617 = sbr.rel (0) target = $region60
            $region59: #{mlp_forward.1} parent=55 // pred_region
              // Predicated region
              $region79: #{mlp_forward.1} parent=59 // pred_check
                _
              $region80: #{mlp_forward.1} parent=59 // pred_check_branch
                %669 = sbr.rel (0) target = $region82
              $region81: #{mlp_forward.1} parent=59 // pred_region
                %s670 = sshrl.u32 %s608, 1
                // While loop
                $region83: #{mlp_forward.1} parent=81 // loop_pre_header
                  _
                $region84: #{mlp_forward.1} parent=81 // loop_header
                  %s672 = sphi 0, %s674
                  %p673 = scmp.ge.s32.totalorder %s672, %s670
                  %s677 = sphi 0, %s686
                  %s678 = sphi %s601, %s689
                  %s679 = sphi %s612, %s690
                $region85: #{mlp_forward.1} parent=81 // loop_header_branch
                  %676 = sbr.rel (%p673) target = $region89
                $region86: #{mlp_forward.1} parent=81 // loop_body
                  %v680 = vld [vmem:[%s678] sm:$0xff]
                  %681 = vst [vmem:[%s679] sm:$0xff] %v680
                  %v682 = vld [vmem:[%s678 + $0x8] sm:$0xff]
                  %683 = vst [vmem:[%s679 + $0x8] sm:$0xff] %v682
                  %s684 = sadd.s32 1, %s677
                  %p685 = scmp.ge.s32.totalorder %s684, %s670
                  %s686 = scalar_select %p685, 0, %s684
                  %s687 = smul.u32 %s686, 16
                  %s688 = smul.u32 %s686, 16
                  %s689 = scalar_lea.vmem %s601, %s687 [#allocation2]
                  %s690 = scalar_lea.vmem %s612, %s688
                $region87: #{mlp_forward.1} parent=81 // loop_footer
                  %s674 = sadd.s32 %s672, 1
                $region88: #{mlp_forward.1} parent=81 // loop_footer_branch
                  %671 = sbr.rel target = $region84
                $region89: #{mlp_forward.1} parent=81 // loop_exit
                  _
                %s691 = sshrl.u32 %s608, 1
                %s692 = sand.u32 %s608, 1
                %s693 = smul.u32 %s691, 2
                %s694 = smul.u32 8, %s693
                %s695 = scalar_lea.vmem %s601, %s694 [#allocation2]
                %s696 = smul.u32 8, %s693
                %s697 = scalar_lea.vmem %s612, %s696
                // While loop
                $region90: #{mlp_forward.1} parent=81 // loop_pre_header
                  _
                $region91: #{mlp_forward.1} parent=81 // loop_header
                  %s699 = sphi 0, %s701
                  %p700 = scmp.ge.s32.totalorder %s699, %s692
                  %s704 = sphi 0, %s711
                  %s705 = sphi %s695, %s714
                  %s706 = sphi %s697, %s715
                $region92: #{mlp_forward.1} parent=81 // loop_header_branch
                  %703 = sbr.rel (%p700) target = $region96
                $region93: #{mlp_forward.1} parent=81 // loop_body
                  %v707 = vld [vmem:[%s705] sm:$0xff]
                  %708 = vst [vmem:[%s706] sm:$0xff] %v707
                  %s709 = sadd.s32 1, %s704
                  %p710 = scmp.ge.s32.totalorder %s709, %s692
                  %s711 = scalar_select %p710, 0, %s709
                  %s712 = smul.u32 %s711, 8
                  %s713 = smul.u32 %s711, 8
                  %s714 = scalar_lea.vmem %s695, %s712 [#allocation2]
                  %s715 = scalar_lea.vmem %s697, %s713
                $region94: #{mlp_forward.1} parent=81 // loop_footer
                  %s701 = sadd.s32 %s699, 1
                $region95: #{mlp_forward.1} parent=81 // loop_footer_branch
                  %698 = sbr.rel target = $region91
                $region96: #{mlp_forward.1} parent=81 // loop_exit
                  _
              $region82: #{mlp_forward.1} parent=59 // pred_fallthru
                _
              // Predicated region
              $region97: #{mlp_forward.1} parent=59 // pred_check
                _
              $region98: #{mlp_forward.1} parent=59 // pred_check_branch
                %717 = sbr.rel target = $region100
              $region99: #{mlp_forward.1} parent=59 // pred_region
                _
              $region100: #{mlp_forward.1} parent=59 // pred_fallthru
                _
            $region60: #{mlp_forward.1} parent=55 // pred_fallthru
              _
            // Predicated region
            $region61: #{mlp_forward.1} parent=55 // pred_check
              _
            $region62: #{mlp_forward.1} parent=55 // pred_check_branch
              %619 = sbr.rel target = $region64
            $region63: #{mlp_forward.1} parent=55 // pred_region
              %s621 = ssub.s32 256, 1
              %s622 = sshrl.u32 %s608, 1
              // While loop
              $region65: #{mlp_forward.1} parent=63 // loop_pre_header
                _
              $region66: #{mlp_forward.1} parent=63 // loop_header
                %s624 = sphi 0, %s626
                %p625 = scmp.ge.s32.totalorder %s624, %s622
                %s629 = sphi 0, %s638
                %s630 = sphi %s601, %s641
                %s631 = sphi %s612, %s642
              $region67: #{mlp_forward.1} parent=63 // loop_header_branch
                %628 = sbr.rel (%p625) target = $region71
              $region68: #{mlp_forward.1} parent=63 // loop_body
                %v632 = vld [vmem:[%s630] sm:%s621]
                %633 = vst [vmem:[%s631] sm:%s621] %v632
                %v634 = vld [vmem:[%s630 + $0x8] sm:%s621]
                %635 = vst [vmem:[%s631 + $0x8] sm:%s621] %v634
                %s636 = sadd.s32 1, %s629
                %p637 = scmp.ge.s32.totalorder %s636, %s622
                %s638 = scalar_select %p637, 0, %s636
                %s639 = smul.u32 %s638, 16
                %s640 = smul.u32 %s638, 16
                %s641 = scalar_lea.vmem %s601, %s639 [#allocation2]
                %s642 = scalar_lea.vmem %s612, %s640
              $region69: #{mlp_forward.1} parent=63 // loop_footer
                %s626 = sadd.s32 %s624, 1
              $region70: #{mlp_forward.1} parent=63 // loop_footer_branch
                %623 = sbr.rel target = $region66
              $region71: #{mlp_forward.1} parent=63 // loop_exit
                _
              %s643 = sshrl.u32 %s608, 1
              %s644 = sand.u32 %s608, 1
              %s645 = smul.u32 %s643, 2
              %s646 = smul.u32 8, %s645
              %s647 = scalar_lea.vmem %s601, %s646 [#allocation2]
              %s648 = smul.u32 8, %s645
              %s649 = scalar_lea.vmem %s612, %s648
              // While loop
              $region72: #{mlp_forward.1} parent=63 // loop_pre_header
                _
              $region73: #{mlp_forward.1} parent=63 // loop_header
                %s651 = sphi 0, %s653
                %p652 = scmp.ge.s32.totalorder %s651, %s644
                %s656 = sphi 0, %s663
                %s657 = sphi %s647, %s666
                %s658 = sphi %s649, %s667
              $region74: #{mlp_forward.1} parent=63 // loop_header_branch
                %655 = sbr.rel (%p652) target = $region78
              $region75: #{mlp_forward.1} parent=63 // loop_body
                %v659 = vld [vmem:[%s657] sm:%s621]
                %660 = vst [vmem:[%s658] sm:%s621] %v659
                %s661 = sadd.s32 1, %s656
                %p662 = scmp.ge.s32.totalorder %s661, %s644
                %s663 = scalar_select %p662, 0, %s661
                %s664 = smul.u32 %s663, 8
                %s665 = smul.u32 %s663, 8
                %s666 = scalar_lea.vmem %s647, %s664 [#allocation2]
                %s667 = scalar_lea.vmem %s649, %s665
              $region76: #{mlp_forward.1} parent=63 // loop_footer
                %s653 = sadd.s32 %s651, 1
              $region77: #{mlp_forward.1} parent=63 // loop_footer_branch
                %650 = sbr.rel target = $region73
              $region78: #{mlp_forward.1} parent=63 // loop_exit
                _
            $region64: #{mlp_forward.1} parent=55 // pred_fallthru
              _
          $region56: #{mlp_forward.1} parent=51 // pred_fallthru
            _
          %718 = vnop
        $region52: #{mlp_forward.1} parent=47 // pred_fallthru
          _
      $region48: #{mlp_forward.1} parent=5 // pred_fallthru
        _
      %p719 = scmp.le.s32.totalorder 2, %s13
      // Predicated region
      $region101: #{mlp_forward.1} parent=5 // pred_check
        %p720 = pneg %p719
      $region102: #{mlp_forward.1} parent=5 // pred_check_branch
        %722 = sbr.rel (%p720) target = $region104
      $region103: #{mlp_forward.1} parent=5 // pred_region
        %s723 = ssub.s32 %s13, 2
        // Predicated region
        $region105: #{mlp_forward.1} parent=103 // pred_check
          %p724 = pneg %p194
        $region106: #{mlp_forward.1} parent=103 // pred_check_branch
          %726 = sbr.rel (%p724) target = $region108
        $region107: #{mlp_forward.1} parent=103 // pred_region
          %s727 = sand.u32 %s179, 1
          %s728 = sand.u32 %s179, 1
          %s729 = smul.addr %s728, 16
          %s730 = scalar_lea.vmem [#allocation2], %s729
        $region108: #{mlp_forward.1} parent=103 // pred_fallthru
          _
      $region104: #{mlp_forward.1} parent=5 // pred_fallthru
        _
    $region6: #{mlp_forward.1} parent=1 // loop_footer
      %s17 = sadd.s32 1, %s13
    $region7: #{mlp_forward.1} parent=1 // loop_footer_branch
      %12 = sbr.rel target = $region3
    $region8: #{mlp_forward.1} parent=1 // loop_exit
      _

</llo_original>
